<compile_context>
chip_gen: v7x
topology: tpu7x:2x2x1
jax: 0.10.0
libtpu: 0.0.40
codegen_flags: <defaults>
</compile_context>

<pallas_src>
import functools

import jax
import jax.numpy as jnp
from jax.experimental import pallas as pl
from jax.experimental.pallas import tpu as pltpu


def _round_up(n: int, m: int) -> int:
    return ((n + m - 1) // m) * m


def decoder_kernel(x_ref, w1_ref, b1_ref, w2_ref, b2_ref, o_ref):
    # x block arrives already bf16; weights are pre-cast bf16; biases are f32.
    # linear1: [TM, Kp] @ [Kp, Hp] (bf16 in, f32 acc) + bias (f32)
    h = jnp.dot(x_ref[...], w1_ref[...],
                preferred_element_type=jnp.float32) + b1_ref[...]

    # linear2: [TM, Hp] @ [Hp, Np] (bf16 in, f32 acc) + bias (f32)
    z = jnp.dot(h.astype(jnp.bfloat16), w2_ref[...],
                preferred_element_type=jnp.float32) + b2_ref[...]

    # sigmoid via tanh: single EUP op per element; the mul/add ride free on the
    # VPU slots; result stays exactly inside (0, 1).
    o_ref[...] = (0.5 * jnp.tanh(0.5 * z) + 0.5).astype(o_ref.dtype)


def make_decoder(w1, b1, w2, b2, *, block_m=256):
    """One-time parameter prep (pad + bf16 cast). Returns jitted forward(x)->[B, out]."""
    latent, hidden = w1.shape
    out_dim = w2.shape[1]

    # Lane-dense padding for every feature axis (padding is zero => result unchanged).
    Kp = _round_up(latent, 128)
    Hp = _round_up(hidden, 128)
    Np = _round_up(out_dim, 128)

    w1p = jnp.zeros((Kp, Hp), jnp.bfloat16).at[:latent, :hidden].set(
        w1.astype(jnp.bfloat16))
    b1p = jnp.zeros((1, Hp), jnp.float32).at[:, :hidden].set(
        b1.reshape(1, hidden).astype(jnp.float32))
    w2p = jnp.zeros((Hp, Np), jnp.bfloat16).at[:hidden, :out_dim].set(
        w2.astype(jnp.bfloat16))
    b2p = jnp.zeros((1, Np), jnp.float32).at[:, :out_dim].set(
        b2.reshape(1, out_dim).astype(jnp.float32))

    @jax.jit
    def forward(x):
        B = x.shape[0]

        # Batch tile: multiple of 8 sublanes, capped at block_m, and arranged so
        # the grid has >= 2 steps (v7x megacore sharding of the "parallel" axis).
        TM = min(block_m, max(8, _round_up(B, 8)))
        if _round_up(B, TM) // TM < 2 and TM >= 16:
            TM = _round_up(TM // 2, 8)
        Bp = _round_up(B, TM)
        if Bp // TM < 2:
            Bp = 2 * TM  # tiny B: pad a second (all-zero) tile so both TCs get work
        grid = (Bp // TM,)

        # Pad + cast x to bf16 (halves the streamed input DMA per grid step).
        xp = jnp.zeros((Bp, Kp), jnp.bfloat16).at[:B, :latent].set(
            x.astype(jnp.bfloat16))

        # VMEM budget: resident weights single-buffered + double-buffered x/o tiles.
        resident = w1p.size * 2 + b1p.size * 4 + w2p.size * 2 + b2p.size * 4
        streamed = 2 * TM * Kp * 2 + 2 * TM * Np * 4
        vmem_limit = min(int(1.5 * (resident + streamed)) + (4 << 20), 64 << 20)

        out_padded = pl.pallas_call(
            decoder_kernel,
            out_shape=jax.ShapeDtypeStruct((Bp, Np), jnp.float32),
            grid=grid,
            in_specs=[
                # x: streamed over batch (double-buffered by default).
                pl.BlockSpec((TM, Kp), lambda i: (i, 0)),
                # Resident weights/biases: constant index_map, single-buffered.
                pl.BlockSpec((Kp, Hp), lambda i: (0, 0), pipeline_mode=pl.Buffered(1)),
                pl.BlockSpec((1, Hp), lambda i: (0, 0), pipeline_mode=pl.Buffered(1)),
                pl.BlockSpec((Hp, Np), lambda i: (0, 0), pipeline_mode=pl.Buffered(1)),
                pl.BlockSpec((1, Np), lambda i: (0, 0), pipeline_mode=pl.Buffered(1)),
            ],
            out_specs=pl.BlockSpec((TM, Np), lambda i: (i, 0)),  # lane-dense output
            compiler_params=pltpu.CompilerParams(
                dimension_semantics=("parallel",),   # batch axis across v7x's 2 TCs
                vmem_limit_bytes=vmem_limit),
            cost_estimate=pl.CostEstimate(
                flops=2 * B * (latent * hidden + hidden * out_dim),   # unpadded
                transcendentals=B * out_dim,                           # one tanh/elem
                bytes_accessed=B * latent * 2 + resident + B * out_dim * 4),
        )(xp, w1p, b1p, w2p, b2p)

        return out_padded[:B, :out_dim]

    return forward


def init_linear_params(key, in_features, out_features):
    """Deterministic init mimicking torch.nn.Linear default (U(-1/sqrt(in), 1/sqrt(in)))."""
    k_w, k_b = jax.random.split(key)
    bound = 1.0 / jnp.sqrt(in_features)
    # Stored transposed relative to PyTorch: [in_features, out_features].
    w = jax.random.uniform(k_w, (in_features, out_features), jnp.float32, -bound, bound)
    b = jax.random.uniform(k_b, (1, out_features), jnp.float32, -bound, bound)
    return w, b


def reference_forward(x, w1, b1, w2, b2):
    h = x @ w1 + b1
    return jax.nn.sigmoid(h @ w2 + b2)


if __name__ == "__main__":
    # Small shapes consistent with Decoder(latent_size, hidden_size, output_size)
    batch, latent_size, hidden_size, output_size = 4, 16, 32, 64

    key = jax.random.PRNGKey(0)
    k_x, k_l1, k_l2 = jax.random.split(key, 3)

    x = jax.random.normal(k_x, (batch, latent_size), jnp.float32)
    w1, b1 = init_linear_params(k_l1, latent_size, hidden_size)
    w2, b2 = init_linear_params(k_l2, hidden_size, output_size)

    decoder = make_decoder(w1, b1, w2, b2)   # one-time pad + bf16 cast of params
    out = decoder(x)
    out = jax.block_until_ready(out)

    # Correctness check against pure-JAX f32 reference. Tolerance accounts for
    # bf16 matmul inputs (f32 accumulation); the sigmoid itself is exact
    # (tanh form, no approximate reciprocal) and bounded in (0, 1).
    ref = reference_forward(x, w1, b1, w2, b2)
    assert out.shape == (batch, output_size)
    assert bool(jnp.all((out > 0.0) & (out < 1.0)))
    assert jnp.allclose(out, ref, atol=2e-2, rtol=2e-2), (
        f"max abs diff {float(jnp.max(jnp.abs(out - ref)))}")

    print("KERNEL_OK")
</pallas_src>

<mosaic_0001>
module attributes {stable_mosaic.version = 11 : i64} {
  func.func @decoder_kernel(%arg0: i32, %arg1: memref<8x128xbf16, #tpu.memory_space<vmem>>, %arg2: memref<128x128xbf16, #tpu.memory_space<vmem>>, %arg3: memref<1x128xf32, #tpu.memory_space<vmem>>, %arg4: memref<128x128xbf16, #tpu.memory_space<vmem>>, %arg5: memref<1x128xf32, #tpu.memory_space<vmem>>, %arg6: memref<8x128xf32, #tpu.memory_space<vmem>>) attributes {dimension_semantics = [#tpu.dimension_semantics<parallel>], iteration_bounds = array<i64: 2>, scalar_prefetch = 0 : i64, scratch_operands = 0 : i64, tpu.core_type = #tpu.core_type<tc>, window_params = [{transform_indices = @transform_0, window_bounds = array<i64: 8, 128>}, {pipeline_mode = #tpu.pipeline_mode<synchronous>, transform_indices = @transform_1, window_bounds = array<i64: 128, 128>}, {pipeline_mode = #tpu.pipeline_mode<synchronous>, transform_indices = @transform_2, window_bounds = array<i64: 1, 128>}, {pipeline_mode = #tpu.pipeline_mode<synchronous>, transform_indices = @transform_3, window_bounds = array<i64: 128, 128>}, {pipeline_mode = #tpu.pipeline_mode<synchronous>, transform_indices = @transform_4, window_bounds = array<i64: 1, 128>}, {transform_indices = @transform_5, window_bounds = array<i64: 8, 128>}]} {
    %c0 = arith.constant 0 : index
    %c0_0 = arith.constant 0 : index
    %0 = vector.load %arg1[%c0, %c0_0] : memref<8x128xbf16, #tpu.memory_space<vmem>>, vector<8x128xbf16>
    %c0_1 = arith.constant 0 : index
    %c0_2 = arith.constant 0 : index
    %1 = vector.load %arg2[%c0_1, %c0_2] : memref<128x128xbf16, #tpu.memory_space<vmem>>, vector<128x128xbf16>
    %cst = arith.constant dense<0.000000e+00> : vector<8x128xf32>
    %2 = tpu.matmul %0, %1, %cst {dimension_numbers = #tpu.dot_dimension_numbers<[1], [0], [0], [1], [0, 0, 1, 1], [], []>} : vector<8x128xbf16>, vector<128x128xbf16>, vector<8x128xf32> -> vector<8x128xf32>
    %c0_3 = arith.constant 0 : index
    %c0_4 = arith.constant 0 : index
    %3 = vector.load %arg3[%c0_3, %c0_4] : memref<1x128xf32, #tpu.memory_space<vmem>>, vector<1x128xf32>
    %4 = vector.broadcast %3 : vector<1x128xf32> to vector<8x128xf32>
    %5 = arith.addf %2, %4 : vector<8x128xf32>
    %6 = arith.truncf %5 : vector<8x128xf32> to vector<8x128xbf16>
    %c0_5 = arith.constant 0 : index
    %c0_6 = arith.constant 0 : index
    %7 = vector.load %arg4[%c0_5, %c0_6] : memref<128x128xbf16, #tpu.memory_space<vmem>>, vector<128x128xbf16>
    %cst_7 = arith.constant dense<0.000000e+00> : vector<8x128xf32>
    %8 = tpu.matmul %6, %7, %cst_7 {dimension_numbers = #tpu.dot_dimension_numbers<[1], [0], [0], [1], [0, 0, 1, 1], [], []>} : vector<8x128xbf16>, vector<128x128xbf16>, vector<8x128xf32> -> vector<8x128xf32>
    %c0_8 = arith.constant 0 : index
    %c0_9 = arith.constant 0 : index
    %9 = vector.load %arg5[%c0_8, %c0_9] : memref<1x128xf32, #tpu.memory_space<vmem>>, vector<1x128xf32>
    %10 = vector.broadcast %9 : vector<1x128xf32> to vector<8x128xf32>
    %11 = arith.addf %8, %10 : vector<8x128xf32>
    %cst_10 = arith.constant 5.000000e-01 : f32
    %12 = vector.broadcast %cst_10 : f32 to vector<8x128xf32>
    %13 = arith.mulf %12, %11 : vector<8x128xf32>
    %14 = math.tanh %13 : vector<8x128xf32>
    %cst_11 = arith.constant 5.000000e-01 : f32
    %15 = vector.broadcast %cst_11 : f32 to vector<8x128xf32>
    %16 = arith.mulf %15, %14 : vector<8x128xf32>
    %cst_12 = arith.constant 5.000000e-01 : f32
    %17 = vector.broadcast %cst_12 : f32 to vector<8x128xf32>
    %18 = arith.addf %16, %17 : vector<8x128xf32>
    %c0_13 = arith.constant 0 : index
    %c0_14 = arith.constant 0 : index
    %19 = vector.load %arg6[%c0_13, %c0_14] : memref<8x128xf32, #tpu.memory_space<vmem>>, vector<8x128xf32>
    tpu.vector_store %arg6[%c0_13, %c0_14], %18 {strides = array<i32>} : memref<8x128xf32, #tpu.memory_space<vmem>>, vector<8x128xf32>,
    return
  }
  func.func @transform_0(%arg0: i32) -> (i32, i32) {
    %c0_i32 = arith.constant 0 : i32
    %c0_i32_0 = arith.constant 0 : i32
    return %arg0, %c0_i32 : i32, i32
  }
  func.func @transform_1(%arg0: i32) -> (i32, i32) {
    %c0_i32 = arith.constant 0 : i32
    %c0_i32_0 = arith.constant 0 : i32
    %c0_i32_1 = arith.constant 0 : i32
    return %c0_i32, %c0_i32_0 : i32, i32
  }
  func.func @transform_2(%arg0: i32) -> (i32, i32) {
    %c0_i32 = arith.constant 0 : i32
    %c0_i32_0 = arith.constant 0 : i32
    %c0_i32_1 = arith.constant 0 : i32
    return %c0_i32, %c0_i32_0 : i32, i32
  }
  func.func @transform_3(%arg0: i32) -> (i32, i32) {
    %c0_i32 = arith.constant 0 : i32
    %c0_i32_0 = arith.constant 0 : i32
    %c0_i32_1 = arith.constant 0 : i32
    return %c0_i32, %c0_i32_0 : i32, i32
  }
  func.func @transform_4(%arg0: i32) -> (i32, i32) {
    %c0_i32 = arith.constant 0 : i32
    %c0_i32_0 = arith.constant 0 : i32
    %c0_i32_1 = arith.constant 0 : i32
    return %c0_i32, %c0_i32_0 : i32, i32
  }
  func.func @transform_5(%arg0: i32) -> (i32, i32) {
    %c0_i32 = arith.constant 0 : i32
    %c0_i32_0 = arith.constant 0 : i32
    return %arg0, %c0_i32 : i32, i32
  }
}

</mosaic_0001>

<llo_original>
// kernel: forward.1
$region0: #{forward.1}
  #allocation0 [shape = 'u32[]', space=smem, size = 0x4, offset = 0x4, fixed_abs, tag = 'smem constant byte address 0x4 - core index']
  #allocation1 [shape = 'u32[144,128]{1,0:T(1,128)}', space=vmem, size = 0x12000, scoped, tag = 'internal scratch']
  %s0 = inlined_call_operand.vmem [shape: bf16[16,128], index: 0, kind: input, shape index: {}]
  %s1 = inlined_call_operand.hbm [shape: bf16[128,128], index: 1, kind: input, shape index: {}]
  %s2 = inlined_call_operand.vmem [shape: f32[1,128], index: 2, kind: input, shape index: {}]
  %s3 = inlined_call_operand.hbm [shape: bf16[128,128], index: 3, kind: input, shape index: {}]
  %s4 = inlined_call_operand.vmem [shape: f32[1,128], index: 4, kind: input, shape index: {}]
  %s5 = inlined_call_operand.vmem [shape: f32[16,128], index: 5, kind: output, shape index: {}]
  %s6 = sld [smem:[#allocation0]]
  $region61: #{forward.1} parent=0
    _
  %s8 = ssub.s32 1, %s6
  %s9 = scalar_select 0, %s8, %s6
  $region1: #{forward.1} parent=0
    #allocation2 [shape = 'u8[32768]{0}', space=vmem, size = 0x8000, scoped, tag = 'input window, operand 1, single buffered']
    #allocation3 [shape = 's32[2]{0}', space=sflag, size = 0x8, scoped, tag = 'scoped memory for forward.1']
    #allocation4 [shape = 'u8[32768]{0}', space=vmem, size = 0x8000, scoped, tag = 'input window, operand 3, single buffered']
    #allocation5 [shape = 's32[1]{0}', space=sflag, size = 0x4, scoped, tag = 'scoped memory for forward.1']
    %10 = vsyncpa [#allocation3], 0
    %11 = vsyncpa [#allocation5], 0
    loop: start=0, step=1, limit=4
    $region2: #{forward.1} parent=1 // loop_pre_header
      _
    $region3: #{forward.1} parent=1 // loop_header
      %s13 = sphi 0, %s17
      %p14 = scmp.ge.s32.totalorder %s13, 4
      %s23 = sphi 0, %s25
      %s26 = sphi 0, %s23
      %s27 = sphi 0, %s26
      %s43 = sphi 0, %s27
      %s47 = sphi 0, %s47
      %s49 = sphi 0, %s47
      %s50 = sphi 0, %s49
      %s64 = sphi 0, %s50
      %s68 = sphi 0, %s68
      %s70 = sphi 0, %s68
      %s71 = sphi 0, %s70
      %s85 = sphi 0, %s71
      %s89 = sphi 0, %s89
      %s91 = sphi 0, %s89
      %s92 = sphi 0, %s91
      %s106 = sphi 0, %s92
      %s110 = sphi 0, %s110
      %s112 = sphi 0, %s110
      %s113 = sphi 0, %s112
      %s127 = sphi 0, %s113
      %s133 = sphi 0, %s135
      %s136 = sphi 0, %s133
      %s137 = sphi 0, %s136
      %s153 = sphi 0, %s137
    $region4: #{forward.1} parent=1 // loop_header_branch
      %16 = sbr.rel (%p14) target = $region8
    $region5: #{forward.1} parent=1 // loop_body
      %s18 = ssub.s32 %s13, 1
      %s19 = ssub.s32 %s13, 2
      %s20 = sadd.s32 %s13, 1
      %s21 = ssub.s32 %s13, %s20
      %p22 = scmp.eq.s32.totalorder %s21, 0
      %s24 = sadd.s32 %s23, 1
      %s25 = scalar_select %p22, %s23, %s24
      %p28 = pneg %p22
      %p29 = scmp.eq.s32.totalorder %s13, 1
      %p30 = por %p28, %p29
      %p31 = scmp.ne.s32.totalorder %s23, %s26
      %p32 = scmp.eq.s32.totalorder %s13, 0
      %p33 = por %p31, %p32
      %p34 = scmp.ne.s32.totalorder %s23, %s26
      %p35 = scmp.eq.s32.totalorder %s18, 1
      %p36 = por %p34, %p35
      %p37 = scmp.ne.s32.totalorder %s26, %s27
      %p38 = scmp.eq.s32.totalorder %s18, 0
      %p39 = por %p37, %p38
      %p40 = scmp.ne.s32.totalorder %s26, %s27
      %p41 = scmp.eq.s32.totalorder %s19, 1
      %p42 = por %p40, %p41
      %p44 = scmp.ne.s32.totalorder %s27, %s43
      %p45 = scmp.eq.s32.totalorder %s19, 0
      %p46 = por %p44, %p45
      %s48 = sadd.s32 %s47, 1
      %p51 = scmp.eq.s32.totalorder %s13, 1
      %p52 = scmp.ne.s32.totalorder %s47, %s49
      %p53 = scmp.eq.s32.totalorder %s13, 0
      %p54 = por %p52, %p53
      %p55 = scmp.ne.s32.totalorder %s47, %s49
      %p56 = scmp.eq.s32.totalorder %s18, 1
      %p57 = por %p55, %p56
      %p58 = scmp.ne.s32.totalorder %s49, %s50
      %p59 = scmp.eq.s32.totalorder %s18, 0
      %p60 = por %p58, %p59
      %p61 = scmp.ne.s32.totalorder %s49, %s50
      %p62 = scmp.eq.s32.totalorder %s19, 1
      %p63 = por %p61, %p62
      %p65 = scmp.ne.s32.totalorder %s50, %s64
      %p66 = scmp.eq.s32.totalorder %s19, 0
      %p67 = por %p65, %p66
      %s69 = sadd.s32 %s68, 1
      %p72 = scmp.eq.s32.totalorder %s13, 1
      %p73 = scmp.ne.s32.totalorder %s68, %s70
      %p74 = scmp.eq.s32.totalorder %s13, 0
      %p75 = por %p73, %p74
      %p76 = scmp.ne.s32.totalorder %s68, %s70
      %p77 = scmp.eq.s32.totalorder %s18, 1
      %p78 = por %p76, %p77
      %p79 = scmp.ne.s32.totalorder %s70, %s71
      %p80 = scmp.eq.s32.totalorder %s18, 0
      %p81 = por %p79, %p80
      %p82 = scmp.ne.s32.totalorder %s70, %s71
      %p83 = scmp.eq.s32.totalorder %s19, 1
      %p84 = por %p82, %p83
      %p86 = scmp.ne.s32.totalorder %s71, %s85
      %p87 = scmp.eq.s32.totalorder %s19, 0
      %p88 = por %p86, %p87
      %s90 = sadd.s32 %s89, 1
      %p93 = scmp.eq.s32.totalorder %s13, 1
      %p94 = scmp.ne.s32.totalorder %s89, %s91
      %p95 = scmp.eq.s32.totalorder %s13, 0
      %p96 = por %p94, %p95
      %p97 = scmp.ne.s32.totalorder %s89, %s91
      %p98 = scmp.eq.s32.totalorder %s18, 1
      %p99 = por %p97, %p98
      %p100 = scmp.ne.s32.totalorder %s91, %s92
      %p101 = scmp.eq.s32.totalorder %s18, 0
      %p102 = por %p100, %p101
      %p103 = scmp.ne.s32.totalorder %s91, %s92
      %p104 = scmp.eq.s32.totalorder %s19, 1
      %p105 = por %p103, %p104
      %p107 = scmp.ne.s32.totalorder %s92, %s106
      %p108 = scmp.eq.s32.totalorder %s19, 0
      %p109 = por %p107, %p108
      %s111 = sadd.s32 %s110, 1
      %p114 = scmp.eq.s32.totalorder %s13, 1
      %p115 = scmp.ne.s32.totalorder %s110, %s112
      %p116 = scmp.eq.s32.totalorder %s13, 0
      %p117 = por %p115, %p116
      %p118 = scmp.ne.s32.totalorder %s110, %s112
      %p119 = scmp.eq.s32.totalorder %s18, 1
      %p120 = por %p118, %p119
      %p121 = scmp.ne.s32.totalorder %s112, %s113
      %p122 = scmp.eq.s32.totalorder %s18, 0
      %p123 = por %p121, %p122
      %p124 = scmp.ne.s32.totalorder %s112, %s113
      %p125 = scmp.eq.s32.totalorder %s19, 1
      %p126 = por %p124, %p125
      %p128 = scmp.ne.s32.totalorder %s113, %s127
      %p129 = scmp.eq.s32.totalorder %s19, 0
      %p130 = por %p128, %p129
      %s131 = ssub.s32 %s13, %s20
      %p132 = scmp.eq.s32.totalorder %s131, 0
      %s134 = sadd.s32 %s133, 1
      %s135 = scalar_select %p132, %s133, %s134
      %p138 = pneg %p132
      %p139 = scmp.eq.s32.totalorder %s13, 1
      %p140 = por %p138, %p139
      %p141 = scmp.ne.s32.totalorder %s133, %s136
      %p142 = scmp.eq.s32.totalorder %s13, 0
      %p143 = por %p141, %p142
      %p144 = scmp.ne.s32.totalorder %s133, %s136
      %p145 = scmp.eq.s32.totalorder %s18, 1
      %p146 = por %p144, %p145
      %p147 = scmp.ne.s32.totalorder %s136, %s137
      %p148 = scmp.eq.s32.totalorder %s18, 0
      %p149 = por %p147, %p148
      %p150 = scmp.ne.s32.totalorder %s136, %s137
      %p151 = scmp.eq.s32.totalorder %s19, 1
      %p152 = por %p150, %p151
      %p154 = scmp.ne.s32.totalorder %s137, %s153
      %p155 = scmp.eq.s32.totalorder %s19, 0
      %p156 = por %p154, %p155
      %p157 = scmp.le.s32.totalorder 1, %s13
      %p158 = scmp.lt.s32.totalorder %s13, 3
      %p159 = pnand %p157, %p158
      %p160 = pneg %p159
      // Predicated region
      $region9: #{forward.1} parent=5 // pred_check
        _
      $region10: #{forward.1} parent=5 // pred_check_branch
        %162 = sbr.rel (%p159) target = $region12
      $region11: #{forward.1} parent=5 // pred_region
        %s163 = ssub.s32 %s13, 1
        // Predicated region
        $region13: #{forward.1} parent=11 // pred_check
          %p164 = pneg %p60
        $region14: #{forward.1} parent=11 // pred_check_branch
          %166 = sbr.rel (%p164) target = $region16
        $region15: #{forward.1} parent=11 // pred_region
          %s168 = ssub.s32 1024, 1024
          %169 = vsyncadd [#allocation3], %s168
          %s170 = sshll.u32 [#allocation2], 4
          %s171 = int_to_ptr.vmem [resolvable:$true] %s170
          %176 = dma.hbm_to_vmem [thread:$0]  %s1, 1024, %s171, [#allocation3], 64, 64, 4
        $region16: #{forward.1} parent=11 // pred_fallthru
          _
        // Predicated region
        $region17: #{forward.1} parent=11 // pred_check
          %p177 = pneg %p81
        $region18: #{forward.1} parent=11 // pred_check_branch
          %179 = sbr.rel (%p177) target = $region20
        $region19: #{forward.1} parent=11 // pred_region
          _
        $region20: #{forward.1} parent=11 // pred_fallthru
          _
        // Predicated region
        $region21: #{forward.1} parent=11 // pred_check
          %p180 = pneg %p102
        $region22: #{forward.1} parent=11 // pred_check_branch
          %182 = sbr.rel (%p180) target = $region24
        $region23: #{forward.1} parent=11 // pred_region
          %s184 = ssub.s32 1024, 1024
          %185 = vsyncadd [#allocation5], %s184
          %s186 = sshll.u32 [#allocation4], 4
          %s187 = int_to_ptr.vmem [resolvable:$true] %s186
          %192 = dma.hbm_to_vmem [thread:$0]  %s3, 1024, %s187, [#allocation5], 64, 64, 4
        $region24: #{forward.1} parent=11 // pred_fallthru
          _
        // Predicated region
        $region25: #{forward.1} parent=11 // pred_check
          %p193 = pneg %p123
        $region26: #{forward.1} parent=11 // pred_check_branch
          %195 = sbr.rel (%p193) target = $region28
        $region27: #{forward.1} parent=11 // pred_region
          _
        $region28: #{forward.1} parent=11 // pred_fallthru
          _
      $region12: #{forward.1} parent=5 // pred_fallthru
        _
      %p196 = scmp.lt.s32.totalorder %s13, 2
      // Predicated region
      $region29: #{forward.1} parent=5 // pred_check
        %p197 = pneg %p196
      $region30: #{forward.1} parent=5 // pred_check_branch
        %199 = sbr.rel (%p197) target = $region32
      $region31: #{forward.1} parent=5 // pred_region
        // Predicated region
        $region33: #{forward.1} parent=31 // pred_check
          %p200 = pneg %p33
        $region34: #{forward.1} parent=31 // pred_check_branch
          %202 = sbr.rel (%p200) target = $region36
        $region35: #{forward.1} parent=31 // pred_region
          %p203 = scmp.lt.s32.totalorder %s13, 1
          %s204 = scalar_select %p203, %s13, 1
          %s205 = smul.addr %s204, 4
          %s206 = scalar_lea.vmem %s0, %s205
        $region36: #{forward.1} parent=31 // pred_fallthru
          _
      $region32: #{forward.1} parent=5 // pred_fallthru
        _
      %p207 = scmp.le.s32.totalorder 1, %s13
      %p208 = scmp.lt.s32.totalorder %s13, 3
      %p209 = pnand %p207, %p208
      %p210 = pneg %p209
      // Predicated region
      $region37: #{forward.1} parent=5 // pred_check
        _
      $region38: #{forward.1} parent=5 // pred_check_branch
        %212 = sbr.rel (%p209) target = $region40
      $region39: #{forward.1} parent=5 // pred_region
        %s213 = ssub.s32 %s13, 1
        // Predicated region
        $region41: #{forward.1} parent=39 // pred_check
          %p214 = pneg %p60
        $region42: #{forward.1} parent=39 // pred_check_branch
          %216 = sbr.rel (%p214) target = $region44
        $region43: #{forward.1} parent=39 // pred_region
          %217 = dma.done [#allocation3], 1024
        $region44: #{forward.1} parent=39 // pred_fallthru
          _
        // Predicated region
        $region45: #{forward.1} parent=39 // pred_check
          %p218 = pneg %p102
        $region46: #{forward.1} parent=39 // pred_check_branch
          %220 = sbr.rel (%p218) target = $region48
        $region47: #{forward.1} parent=39 // pred_region
          %221 = dma.done [#allocation5], 1024
        $region48: #{forward.1} parent=39 // pred_fallthru
          _
        %p222 = scmp.lt.s32.totalorder %s18, 1
        %s223 = scalar_select %p222, %s18, 1
        %s224 = smul.addr %s223, 4
        %s225 = scalar_lea.vmem %s0, %s224
        %p226 = pneg %p39
        %p227 = pneg %p36
        %p228 = pneg %p60
        %p229 = pneg %p57
        %p230 = pneg %p81
        %p231 = pneg %p78
        %p232 = pneg %p102
        %p233 = pneg %p99
        %p234 = pneg %p123
        %p235 = pneg %p120
        %p236 = pneg %p149
        %p237 = pneg %p146
        %p238 = scmp.lt.s32.totalorder %s18, 1
        %s239 = scalar_select %p238, %s18, 1
        %s240 = smul.addr %s239, 8
        %s241 = scalar_lea.vmem %s5, %s240
        %p242 = scmp.lt.s32.totalorder %s18, 1
        %s243 = scalar_select %p242, %s18, 1
        %s244 = smul.addr %s243, 4
        %s245 = scalar_lea.vmem %s0, %s244
        %p246 = scmp.lt.s32.totalorder %s18, 1
        %s247 = scalar_select %p246, %s18, 1
        %s248 = smul.addr %s247, 8
        %s249 = scalar_lea.vmem %s5, %s248
        %v251 = vld [vmem:[%s245] sm:$0xf]
        %v252 = vld [vmem:[#allocation2] sm:$0xf]
        %v253 = vld [vmem:[#allocation2 + $0x4] sm:$0xf]
        %v254 = vld [vmem:[#allocation2 + $0x8] sm:$0xf]
        %v255 = vld [vmem:[#allocation2 + $0xc] sm:$0xf]
        %v256 = vld [vmem:[#allocation2 + $0x10] sm:$0xf]
        %v257 = vld [vmem:[#allocation2 + $0x14] sm:$0xf]
        %v258 = vld [vmem:[#allocation2 + $0x18] sm:$0xf]
        %v259 = vld [vmem:[#allocation2 + $0x1c] sm:$0xf]
        %v260 = vld [vmem:[#allocation2 + $0x20] sm:$0xf]
        %v261 = vld [vmem:[#allocation2 + $0x24] sm:$0xf]
        %v262 = vld [vmem:[#allocation2 + $0x28] sm:$0xf]
        %v263 = vld [vmem:[#allocation2 + $0x2c] sm:$0xf]
        %v264 = vld [vmem:[#allocation2 + $0x30] sm:$0xf]
        %v265 = vld [vmem:[#allocation2 + $0x34] sm:$0xf]
        %v266 = vld [vmem:[#allocation2 + $0x38] sm:$0xf]
        %v267 = vld [vmem:[#allocation2 + $0x3c] sm:$0xf]
        %v268 = vld [vmem:[%s2] sm:$0x1]
        %v270 = vlaneseq
        %v271 = vshrl.u32 %v270, 7
        %v272 = vsub.s32 0, %v271
        %v273 = vrot.slane %v268, %v272
        %v291 = vunpack.c.l.b16 %v252
        %v292 = vunpack.c.l.b16 %v253
        %v293 = vunpack.c.l.b16 %v254
        %v294 = vunpack.c.l.b16 %v255
        %v295 = vunpack.c.l.b16 %v256
        %v296 = vunpack.c.l.b16 %v257
        %v297 = vunpack.c.l.b16 %v258
        %v298 = vunpack.c.l.b16 %v259
        %v299 = vunpack.c.l.b16 %v260
        %v300 = vunpack.c.l.b16 %v261
        %v301 = vunpack.c.l.b16 %v262
        %v302 = vunpack.c.l.b16 %v263
        %v303 = vunpack.c.l.b16 %v264
        %v304 = vunpack.c.l.b16 %v265
        %v305 = vunpack.c.l.b16 %v266
        %v306 = vunpack.c.l.b16 %v267
        %v307 = vpack.c.b16 %v292, %v291
        %v308 = vpack.c.b16 %v294, %v293
        %v309 = vpack.c.b16 %v296, %v295
        %v310 = vpack.c.b16 %v298, %v297
        %v311 = vpack.c.b16 %v300, %v299
        %v312 = vpack.c.b16 %v302, %v301
        %v313 = vpack.c.b16 %v304, %v303
        %v314 = vpack.c.b16 %v306, %v305
        %323 = vmatprep.subr.bf16.mxu0 0
        %324 = vmatpush1.bf16.msra.mxu0 %v307
        %325 = vmatprep.subr.bf16.mxu0 0
        %326 = vmatpush1.bf16.msra.mxu0 %v308
        %327 = vmatprep.subr.bf16.mxu0 0
        %328 = vmatpush1.bf16.msra.mxu0 %v309
        %329 = vmatprep.subr.bf16.mxu0 0
        %330 = vmatpush1.bf16.msra.mxu0 %v310
        %331 = vmatprep.subr.bf16.mxu0 0
        %332 = vmatpush1.bf16.msra.mxu0 %v311
        %333 = vmatprep.subr.bf16.mxu0 0
        %334 = vmatpush1.bf16.msra.mxu0 %v312
        %335 = vmatprep.subr.bf16.mxu0 0
        %336 = vmatpush1.bf16.msra.mxu0 %v313
        %337 = vmatprep.subr.bf16.mxu0 0
        %338 = vmatpush1.bf16.msra.mxu0 %v314
        %339 = vmatprep.subr.bf16.mxu0 0
        %340 = vmatpush1.bf16.msra.mxu0 0
        %341 = vmatprep.subr.bf16.mxu0 0
        %342 = vmatpush1.bf16.msra.mxu0 0
        %343 = vmatprep.subr.bf16.mxu0 0
        %344 = vmatpush1.bf16.msra.mxu0 0
        %345 = vmatprep.subr.bf16.mxu0 0
        %346 = vmatpush1.bf16.msra.mxu0 0
        %347 = vmatprep.subr.bf16.mxu0 0
        %348 = vmatpush1.bf16.msra.mxu0 0
        %349 = vmatprep.subr.bf16.mxu0 0
        %350 = vmatpush1.bf16.msra.mxu0 0
        %351 = vmatprep.subr.bf16.mxu0 0
        %352 = vmatpush1.bf16.msra.mxu0 0
        %353 = vmatprep.subr.bf16.mxu0 0
        %354 = vmatpush1.bf16.msra.mxu0 0
        %355 = vmatprep.mubr.bf16.mxu0 0
        %356 = vmatmul.mubr.bf16.gmra.mrb[0].mxu0 %v251
        %v357 = vpop.f32.mrb[0].mxu0
        %v358 = vadd.f32 %v273, %v357
        %v359 = vpop.f32.mrb[0].mxu0
        %v360 = vpop.f32.mrb[0].mxu0
        %v361 = vpop.f32.mrb[0].mxu0
        %362 = vdwg.mxu0
        %v363 = vpack.c.bf16 %v358, %v358
        %v364 = vld [vmem:[#allocation4] sm:$0xf]
        %v365 = vld [vmem:[#allocation4 + $0x4] sm:$0xf]
        %v366 = vld [vmem:[#allocation4 + $0x8] sm:$0xf]
        %v367 = vld [vmem:[#allocation4 + $0xc] sm:$0xf]
        %v368 = vld [vmem:[#allocation4 + $0x10] sm:$0xf]
        %v369 = vld [vmem:[#allocation4 + $0x14] sm:$0xf]
        %v370 = vld [vmem:[#allocation4 + $0x18] sm:$0xf]
        %v371 = vld [vmem:[#allocation4 + $0x1c] sm:$0xf]
        %v372 = vld [vmem:[#allocation4 + $0x20] sm:$0xf]
        %v373 = vld [vmem:[#allocation4 + $0x24] sm:$0xf]
        %v374 = vld [vmem:[#allocation4 + $0x28] sm:$0xf]
        %v375 = vld [vmem:[#allocation4 + $0x2c] sm:$0xf]
        %v376 = vld [vmem:[#allocation4 + $0x30] sm:$0xf]
        %v377 = vld [vmem:[#allocation4 + $0x34] sm:$0xf]
        %v378 = vld [vmem:[#allocation4 + $0x38] sm:$0xf]
        %v379 = vld [vmem:[#allocation4 + $0x3c] sm:$0xf]
        %v380 = vld [vmem:[%s4] sm:$0x1]
        %v382 = vlaneseq
        %v383 = vshrl.u32 %v382, 7
        %v384 = vsub.s32 0, %v383
        %v385 = vrot.slane %v380, %v384
        %v403 = vunpack.c.l.b16 %v364
        %v404 = vunpack.c.l.b16 %v365
        %v405 = vunpack.c.l.b16 %v366
        %v406 = vunpack.c.l.b16 %v367
        %v407 = vunpack.c.l.b16 %v368
        %v408 = vunpack.c.l.b16 %v369
        %v409 = vunpack.c.l.b16 %v370
        %v410 = vunpack.c.l.b16 %v371
        %v411 = vunpack.c.l.b16 %v372
        %v412 = vunpack.c.l.b16 %v373
        %v413 = vunpack.c.l.b16 %v374
        %v414 = vunpack.c.l.b16 %v375
        %v415 = vunpack.c.l.b16 %v376
        %v416 = vunpack.c.l.b16 %v377
        %v417 = vunpack.c.l.b16 %v378
        %v418 = vunpack.c.l.b16 %v379
        %v419 = vpack.c.b16 %v404, %v403
        %v420 = vpack.c.b16 %v406, %v405
        %v421 = vpack.c.b16 %v408, %v407
        %v422 = vpack.c.b16 %v410, %v409
        %v423 = vpack.c.b16 %v412, %v411
        %v424 = vpack.c.b16 %v414, %v413
        %v425 = vpack.c.b16 %v416, %v415
        %v426 = vpack.c.b16 %v418, %v417
        %435 = vmatprep.subr.bf16.mxu0 0
        %436 = vmatpush1.bf16.msra.mxu0 %v419
        %437 = vmatprep.subr.bf16.mxu0 0
        %438 = vmatpush1.bf16.msra.mxu0 %v420
        %439 = vmatprep.subr.bf16.mxu0 0
        %440 = vmatpush1.bf16.msra.mxu0 %v421
        %441 = vmatprep.subr.bf16.mxu0 0
        %442 = vmatpush1.bf16.msra.mxu0 %v422
        %443 = vmatprep.subr.bf16.mxu0 0
        %444 = vmatpush1.bf16.msra.mxu0 %v423
        %445 = vmatprep.subr.bf16.mxu0 0
        %446 = vmatpush1.bf16.msra.mxu0 %v424
        %447 = vmatprep.subr.bf16.mxu0 0
        %448 = vmatpush1.bf16.msra.mxu0 %v425
        %449 = vmatprep.subr.bf16.mxu0 0
        %450 = vmatpush1.bf16.msra.mxu0 %v426
        %451 = vmatprep.subr.bf16.mxu0 0
        %452 = vmatpush1.bf16.msra.mxu0 0
        %453 = vmatprep.subr.bf16.mxu0 0
        %454 = vmatpush1.bf16.msra.mxu0 0
        %455 = vmatprep.subr.bf16.mxu0 0
        %456 = vmatpush1.bf16.msra.mxu0 0
        %457 = vmatprep.subr.bf16.mxu0 0
        %458 = vmatpush1.bf16.msra.mxu0 0
        %459 = vmatprep.subr.bf16.mxu0 0
        %460 = vmatpush1.bf16.msra.mxu0 0
        %461 = vmatprep.subr.bf16.mxu0 0
        %462 = vmatpush1.bf16.msra.mxu0 0
        %463 = vmatprep.subr.bf16.mxu0 0
        %464 = vmatpush1.bf16.msra.mxu0 0
        %465 = vmatprep.subr.bf16.mxu0 0
        %466 = vmatpush1.bf16.msra.mxu0 0
        %467 = vmatprep.mubr.bf16.mxu0 0
        %468 = vmatmul.mubr.bf16.gmra.mrb[0].mxu0 %v363
        %v469 = vpop.f32.mrb[0].mxu0
        %v470 = vadd.f32 %v385, %v469
        %v471 = vpop.f32.mrb[0].mxu0
        %v472 = vpop.f32.mrb[0].mxu0
        %v473 = vpop.f32.mrb[0].mxu0
        %474 = vdwg.mxu0
        %v475 = vmul.f32 %v470, 0.5
        %v476 = vtanh.pop %v475
        %v477 = vmul.f32 %v476, 0.5
        %v478 = vadd.f32 %v477, 0.5
        %479 = vst [vmem:[%s249] sm:$0xff] %v478
        %p480 = scmp.lt.s32.totalorder %s18, 1
        %s481 = scalar_select %p480, %s18, 1
        %s482 = smul.addr %s481, 8
        %s483 = scalar_lea.vmem %s5, %s482
        // Predicated region
        $region49: #{forward.1} parent=39 // pred_check
          %p484 = pneg %p146
        $region50: #{forward.1} parent=39 // pred_check_branch
          %486 = sbr.rel (%p484) target = $region52
        $region51: #{forward.1} parent=39 // pred_region
          _
        $region52: #{forward.1} parent=39 // pred_fallthru
          _
      $region40: #{forward.1} parent=5 // pred_fallthru
        _
      %p487 = scmp.le.s32.totalorder 2, %s13
      // Predicated region
      $region53: #{forward.1} parent=5 // pred_check
        %p488 = pneg %p487
      $region54: #{forward.1} parent=5 // pred_check_branch
        %490 = sbr.rel (%p488) target = $region56
      $region55: #{forward.1} parent=5 // pred_region
        %s491 = ssub.s32 %s13, 2
        // Predicated region
        $region57: #{forward.1} parent=55 // pred_check
          %p492 = pneg %p152
        $region58: #{forward.1} parent=55 // pred_check_branch
          %494 = sbr.rel (%p492) target = $region60
        $region59: #{forward.1} parent=55 // pred_region
          %p495 = scmp.lt.s32.totalorder %s19, 1
          %s496 = scalar_select %p495, %s19, 1
          %s497 = smul.addr %s496, 8
          %s498 = scalar_lea.vmem %s5, %s497
        $region60: #{forward.1} parent=55 // pred_fallthru
          _
      $region56: #{forward.1} parent=5 // pred_fallthru
        _
    $region6: #{forward.1} parent=1 // loop_footer
      %s17 = sadd.s32 1, %s13
    $region7: #{forward.1} parent=1 // loop_footer_branch
      %12 = sbr.rel target = $region3
    $region8: #{forward.1} parent=1 // loop_exit
      _
    %499 = vsyncpa [#allocation3], 1
    %s500 = scalar_lea.sflag [#allocation3], 1
    %501 = vsyncpa %s500, 1
    %502 = vsyncpa [#allocation5], 1

</llo_original>
